<compile_context>
chip_gen: v7x
topology: tpu7x:2x2x1
jax: 0.10.0
libtpu: 0.0.40
codegen_flags: <defaults>
</compile_context>

<pallas_src>
import jax
import jax.numpy as jnp
from jax.experimental import pallas as pl
from jax.experimental.pallas import tpu as pltpu

EPS = 1e-12


def _power_iter_kernel(u_ref, wt_ref, wsn_ref, unew_ref):
    """One spectral-norm power iteration; emits w_sn^T (bf16) and updated u (f32).

    wt_ref holds W^T with shape (CKK, Cout_pad); padded Cout columns are zero,
    so they contribute nothing to the norms / sigma.
    """
    wt = wt_ref[...]                                            # (CKK, Cout_pad) f32
    u = u_ref[...]                                              # (1, Cout_pad) f32

    # v = l2_normalize(W^T u)  -> column vector (CKK, 1)
    wv = jax.lax.dot_general(wt, u, (((1,), (1,)), ((), ())),
                             preferred_element_type=jnp.float32)
    v = wv * jax.lax.rsqrt(jnp.sum(wv * wv) + 1e-24)

    # u_new = l2_normalize(W v) -> row vector (1, Cout_pad)
    wu = jax.lax.dot_general(v, wt, (((0,), (0,)), ((), ())),
                             preferred_element_type=jnp.float32)
    u_new = wu * jax.lax.rsqrt(jnp.sum(wu * wu) + 1e-24)

    sigma = jnp.sum(u_new * wu)                                 # u . (W v)

    unew_ref[...] = u_new
    wsn_ref[...] = (wt / sigma).astype(jnp.bfloat16)            # W^T / sigma


def _sn_matmul_kernel(wsn_ref, b_ref, p_ref, o_ref):
    """Per-M-tile: patches(bf16) @ w_sn^T(bf16) with f32 accumulation, + bias."""
    acc = jnp.dot(p_ref[...], wsn_ref[...],
                  preferred_element_type=jnp.float32)           # (TILE_M, Cout_pad)
    o_ref[...] = acc + b_ref[...]


def spectral_norm_conv2d(x, w, b, u, *, stride=1, pad=1, tile_m=256):
    """x: (N, Cin, H, W) NCHW; w: (Cout, Cin, k, k); b: (Cout,); u: (Cout,).

    Returns (y_nchw, u_updated) — the conv output and the refreshed power-iteration
    vector (PyTorch updates the u buffer in place each forward).
    """
    N, Cin, H, W = x.shape
    Cout, _, k, _ = w.shape
    Ho = (H + 2 * pad - k) // stride + 1
    Wo = (W + 2 * pad - k) // stride + 1
    CKK = Cin * k * k
    M = N * Ho * Wo
    COUT_PAD = ((Cout + 127) // 128) * 128                      # lane-dense output

    # ---- prologue inputs: W^T, u, bias, zero-padded along Cout ----
    w_t = jnp.pad(w.reshape(Cout, CKK).T, ((0, 0), (0, COUT_PAD - Cout)))
    u2 = jnp.pad(u.reshape(1, Cout), ((0, 0), (0, COUT_PAD - Cout)))
    b2 = jnp.pad(b.reshape(1, Cout), ((0, 0), (0, COUT_PAD - Cout)))

    # ---- kernel 1: power iteration + normalization (runs once) ----
    w_sn_t, u_new = pl.pallas_call(
        _power_iter_kernel,
        out_shape=(jax.ShapeDtypeStruct((CKK, COUT_PAD), jnp.bfloat16),
                   jax.ShapeDtypeStruct((1, COUT_PAD), jnp.float32)),
        grid=(1,),
        in_specs=[
            pl.BlockSpec((1, COUT_PAD), lambda i: (0, 0)),       # u
            pl.BlockSpec((CKK, COUT_PAD), lambda i: (0, 0)),     # W^T
        ],
        out_specs=(
            pl.BlockSpec((CKK, COUT_PAD), lambda i: (0, 0)),     # W_sn^T (bf16)
            pl.BlockSpec((1, COUT_PAD), lambda i: (0, 0)),       # updated u
        ),
        compiler_params=pltpu.CompilerParams(dimension_semantics=("arbitrary",)),
    )(u2, w_t)

    # ---- im2col glue (plain JAX), bf16 patches to halve DMA traffic ----
    xp = jnp.pad(x, ((0, 0), (0, 0), (pad, pad), (pad, pad)))
    cols = []
    for i in range(k):
        for j in range(k):
            cols.append(xp[:, :, i:i + stride * Ho:stride, j:j + stride * Wo:stride])
    patches = jnp.stack(cols, axis=2)                            # (N, Cin, k*k, Ho, Wo)
    patches = (patches.transpose(0, 3, 4, 1, 2)
               .reshape(M, CKK).astype(jnp.bfloat16))            # (M, CKK), bf16

    # ---- kernel 2: tiled, pipelined patches @ W_sn^T + bias ----
    tile_m = min(tile_m, M)
    if tile_m < M:
        tile_m = max(8, (tile_m // 8) * 8)                       # sublane-aligned tile
    grid_m = pl.cdiv(M, tile_m)

    cost = pl.CostEstimate(
        flops=int(2 * M * CKK * COUT_PAD),
        transcendentals=0,
        bytes_accessed=int(M * CKK * 2 + CKK * COUT_PAD * 2
                           + COUT_PAD * 4 + M * COUT_PAD * 4),
    )

    out = pl.pallas_call(
        _sn_matmul_kernel,
        out_shape=jax.ShapeDtypeStruct((M, COUT_PAD), jnp.float32),
        grid=(grid_m,),
        in_specs=[
            pl.BlockSpec((CKK, COUT_PAD), lambda i: (0, 0)),     # W_sn^T (resident)
            pl.BlockSpec((1, COUT_PAD), lambda i: (0, 0)),       # bias   (resident)
            pl.BlockSpec((tile_m, CKK), lambda i: (i, 0)),       # patch tile (pipelined)
        ],
        out_specs=pl.BlockSpec((tile_m, COUT_PAD), lambda i: (i, 0)),
        compiler_params=pltpu.CompilerParams(dimension_semantics=("parallel",)),
        cost_estimate=cost,
    )(w_sn_t, b2, patches)

    y = out[:, :Cout].reshape(N, Ho, Wo, Cout).transpose(0, 3, 1, 2)   # back to NCHW
    u_next = u_new[0, :Cout]
    return y, u_next


if __name__ == "__main__":
    key = jax.random.PRNGKey(0)
    k1, k2, k3, k4 = jax.random.split(key, 4)

    N, Cin, H, W = 2, 4, 16, 16
    Cout, ksize = 8, 3

    # deterministic synthetic parameters (matching params_2nd_Method shapes)
    x = jax.random.normal(k1, (N, Cin, H, W), jnp.float32)
    w = 0.05 * jax.random.normal(k2, (Cout, Cin, ksize, ksize), jnp.float32)
    b = 0.01 * jax.random.normal(k3, (Cout,), jnp.float32)
    u = jax.random.normal(k4, (Cout,), jnp.float32)
    u = u / (jnp.linalg.norm(u) + EPS)          # l2_normalize(u) as in __init__
    # (v buffer is overwritten on the first power iteration, so not needed)

    y, u_next = spectral_norm_conv2d(x, w, b, u)
    y = jax.block_until_ready(y)

    # pure-JAX reference for sanity (power iteration / sigma in f32)
    w_mat = w.reshape(Cout, -1)
    v_ref = w_mat.T @ u
    v_ref = v_ref / (jnp.linalg.norm(v_ref) + EPS)
    u_ref = w_mat @ v_ref
    u_ref = u_ref / (jnp.linalg.norm(u_ref) + EPS)
    sigma = u_ref @ (w_mat @ v_ref)
    w_sn = w / sigma
    # the kernel does the bulk conv matmul in bf16 with f32 accumulation; build
    # the reference the same way so the check isolates kernel correctness.
    y_ref = jax.lax.conv_general_dilated(
        x.astype(jnp.bfloat16), w_sn.astype(jnp.bfloat16),
        window_strides=(1, 1), padding=((1, 1), (1, 1)),
        dimension_numbers=("NCHW", "OIHW", "NCHW"),
        preferred_element_type=jnp.float32) + b.reshape(1, Cout, 1, 1)

    assert jnp.allclose(y, y_ref, atol=2e-3, rtol=2e-3), "conv output mismatch"
    assert jnp.allclose(u_next, u_ref, atol=1e-4, rtol=1e-4), "u update mismatch"

    print("KERNEL_OK")
</pallas_src>

<mosaic_0001>
module attributes {stable_mosaic.version = 11 : i64} {
  func.func @_power_iter_kernel(%arg0: i32, %arg1: memref<1x128xf32, #tpu.memory_space<vmem>>, %arg2: memref<36x128xf32, #tpu.memory_space<vmem>>, %arg3: memref<36x128xbf16, #tpu.memory_space<vmem>>, %arg4: memref<1x128xf32, #tpu.memory_space<vmem>>) attributes {dimension_semantics = [#tpu.dimension_semantics<arbitrary>], iteration_bounds = array<i64: 1>, scalar_prefetch = 0 : i64, scratch_operands = 0 : i64, tpu.core_type = #tpu.core_type<tc>, window_params = [{pipeline_mode = #tpu.pipeline_mode<synchronous>, transform_indices = @transform_0, window_bounds = array<i64: 1, 128>}, {pipeline_mode = #tpu.pipeline_mode<synchronous>, transform_indices = @transform_1, window_bounds = array<i64: 36, 128>}, {pipeline_mode = #tpu.pipeline_mode<synchronous>, transform_indices = @transform_2, window_bounds = array<i64: 36, 128>}, {pipeline_mode = #tpu.pipeline_mode<synchronous>, transform_indices = @transform_3, window_bounds = array<i64: 1, 128>}]} {
    %c0 = arith.constant 0 : index
    %c0_0 = arith.constant 0 : index
    %0 = vector.load %arg2[%c0, %c0_0] : memref<36x128xf32, #tpu.memory_space<vmem>>, vector<36x128xf32>
    %c0_1 = arith.constant 0 : index
    %c0_2 = arith.constant 0 : index
    %1 = vector.load %arg1[%c0_1, %c0_2] : memref<1x128xf32, #tpu.memory_space<vmem>>, vector<1x128xf32>
    %cst = arith.constant dense<0.000000e+00> : vector<36x1xf32>
    %2 = tpu.matmul %0, %1, %cst {dimension_numbers = #tpu.dot_dimension_numbers<[1], [1], [0], [0], [0, 0, 1, 0], [], []>} : vector<36x128xf32>, vector<1x128xf32>, vector<36x1xf32> -> vector<36x1xf32>
    %3 = arith.mulf %2, %2 : vector<36x1xf32>
    %4 = vector.shape_cast %3 : vector<36x1xf32> to vector<1x36x1xf32>
    %cst_3 = arith.constant dense<0.000000e+00> : vector<1xf32>
    %5 = vector.multi_reduction <add>, %4, %cst_3 [1, 2] : vector<1x36x1xf32> to vector<1xf32>
    %6 = vector.shape_cast %5 : vector<1xf32> to vector<1x1x1xf32>
    %7 = vector.extract %6[0, 0, 0] : f32 from vector<1x1x1xf32>
    %cst_4 = arith.constant 1.000000e-24 : f32
    %8 = arith.addf %7, %cst_4 : f32
    %9 = math.rsqrt %8 : f32
    %10 = vector.broadcast %9 : f32 to vector<36x1xf32>
    %11 = arith.mulf %2, %10 : vector<36x1xf32>
    %cst_5 = arith.constant dense<0.000000e+00> : vector<1x128xf32>
    %12 = tpu.matmul %11, %0, %cst_5 {dimension_numbers = #tpu.dot_dimension_numbers<[0], [0], [1], [1], [0, 1, 1, 1], [], []>} : vector<36x1xf32>, vector<36x128xf32>, vector<1x128xf32> -> vector<1x128xf32>
    %13 = arith.mulf %12, %12 : vector<1x128xf32>
    %14 = vector.shape_cast %13 : vector<1x128xf32> to vector<1x1x128xf32>
    %cst_6 = arith.constant dense<0.000000e+00> : vector<1xf32>
    %15 = vector.multi_reduction <add>, %14, %cst_6 [1, 2] : vector<1x1x128xf32> to vector<1xf32>
    %16 = vector.shape_cast %15 : vector<1xf32> to vector<1x1x1xf32>
    %17 = vector.extract %16[0, 0, 0] : f32 from vector<1x1x1xf32>
    %cst_7 = arith.constant 1.000000e-24 : f32
    %18 = arith.addf %17, %cst_7 : f32
    %19 = math.rsqrt %18 : f32
    %20 = vector.broadcast %19 : f32 to vector<1x128xf32>
    %21 = arith.mulf %12, %20 : vector<1x128xf32>
    %22 = arith.mulf %21, %12 : vector<1x128xf32>
    %23 = vector.shape_cast %22 : vector<1x128xf32> to vector<1x1x128xf32>
    %cst_8 = arith.constant dense<0.000000e+00> : vector<1xf32>
    %24 = vector.multi_reduction <add>, %23, %cst_8 [1, 2] : vector<1x1x128xf32> to vector<1xf32>
    %25 = vector.shape_cast %24 : vector<1xf32> to vector<1x1x1xf32>
    %26 = vector.extract %25[0, 0, 0] : f32 from vector<1x1x1xf32>
    %c0_9 = arith.constant 0 : index
    %c0_10 = arith.constant 0 : index
    %27 = vector.load %arg4[%c0_9, %c0_10] : memref<1x128xf32, #tpu.memory_space<vmem>>, vector<1x128xf32>
    tpu.vector_store %arg4[%c0_9, %c0_10], %21 {strides = array<i32>} : memref<1x128xf32, #tpu.memory_space<vmem>>, vector<1x128xf32>,
    %28 = vector.broadcast %26 : f32 to vector<36x128xf32>
    %29 = arith.divf %0, %28 : vector<36x128xf32>
    %30 = arith.truncf %29 : vector<36x128xf32> to vector<36x128xbf16>
    %c0_11 = arith.constant 0 : index
    %c0_12 = arith.constant 0 : index
    %31 = vector.load %arg3[%c0_11, %c0_12] : memref<36x128xbf16, #tpu.memory_space<vmem>>, vector<36x128xbf16>
    tpu.vector_store %arg3[%c0_11, %c0_12], %30 {strides = array<i32>} : memref<36x128xbf16, #tpu.memory_space<vmem>>, vector<36x128xbf16>,
    return
  }
  func.func @transform_0(%arg0: i32) -> (i32, i32) {
    %c0_i32 = arith.constant 0 : i32
    %c0_i32_0 = arith.constant 0 : i32
    %c0_i32_1 = arith.constant 0 : i32
    return %c0_i32, %c0_i32_0 : i32, i32
  }
  func.func @transform_1(%arg0: i32) -> (i32, i32) {
    %c0_i32 = arith.constant 0 : i32
    %c0_i32_0 = arith.constant 0 : i32
    %c0_i32_1 = arith.constant 0 : i32
    return %c0_i32, %c0_i32_0 : i32, i32
  }
  func.func @transform_2(%arg0: i32) -> (i32, i32) {
    %c0_i32 = arith.constant 0 : i32
    %c0_i32_0 = arith.constant 0 : i32
    %c0_i32_1 = arith.constant 0 : i32
    return %c0_i32, %c0_i32_0 : i32, i32
  }
  func.func @transform_3(%arg0: i32) -> (i32, i32) {
    %c0_i32 = arith.constant 0 : i32
    %c0_i32_0 = arith.constant 0 : i32
    %c0_i32_1 = arith.constant 0 : i32
    return %c0_i32, %c0_i32_0 : i32, i32
  }
}

</mosaic_0001>

<llo_original>
// kernel: tpu_custom_call.1
$region0: #{tpu_custom_call.1}
  #allocation0 [shape = 'u32[]', space=smem, size = 0x4, offset = 0x4, fixed_abs, tag = 'smem constant byte address 0x4 - core index']
  #allocation1 [shape = 'u32[144,128]{1,0:T(1,128)}', space=vmem, size = 0x12000, scoped, tag = 'internal scratch']
  %s0 = inlined_call_operand.hbm [shape: f32[1,128], index: 0, kind: input, shape index: {}]
  %s1 = inlined_call_operand.hbm [shape: f32[36,128], index: 1, kind: input, shape index: {}]
  %s2 = inlined_call_operand.hbm [shape: bf16[36,128], index: 2, kind: output, shape index: {0}]
  %s3 = inlined_call_operand.hbm [shape: f32[1,128], index: 3, kind: output, shape index: {1}]
  %4 = xla_tuple %s2, %s3
  %s5 = sld [smem:[#allocation0]]
  $region34: #{tpu_custom_call.1} parent=0
    _
  %s7 = ssub.s32 1, %s5
  %s8 = scalar_select 0, %s7, %s5
  $region1: #{tpu_custom_call.1} parent=0
    #allocation2 [shape = 'u8[512]{0}', space=vmem, size = 0x400, scoped, tag = 'input window, operand 0, single buffered']
    #allocation3 [shape = 's32[1]{0}', space=sflag, size = 0x4, scoped, tag = 'scoped memory for tpu_custom_call.1']
    #allocation4 [shape = 's32[1]{0}', space=sflag, size = 0x4, scoped, tag = 'scoped memory for tpu_custom_call.1']
    #allocation5 [shape = 'u8[20480]{0}', space=vmem, size = 0x5000, scoped, tag = 'input window, operand 1, single buffered']
    #allocation6 [shape = 's32[1]{0}', space=sflag, size = 0x4, scoped, tag = 'scoped memory for tpu_custom_call.1']
    #allocation7 [shape = 'u8[10240]{0}', space=vmem, size = 0x2800, scoped, tag = 'output window, operand 0, single buffered']
    #allocation8 [shape = 'u8[512]{0}', space=vmem, size = 0x400, scoped, tag = 'output window, operand 1, single buffered']
    #allocation9 [shape = 's32[1]{0}', space=sflag, size = 0x4, scoped, tag = 'scoped memory for tpu_custom_call.1']
    %9 = vsyncpa [#allocation3], 0
    %10 = vsyncpa [#allocation6], 0
    %11 = vsyncpa [#allocation4], 0
    %12 = vsyncpa [#allocation9], 0
    // Predicated region
    $region2: #{tpu_custom_call.1} parent=1 // pred_check
      _
    $region3: #{tpu_custom_call.1} parent=1 // pred_check_branch
      %14 = sbr.rel (0) target = $region5
    $region4: #{tpu_custom_call.1} parent=1 // pred_region
      %s16 = ssub.s32 16, 16
      %17 = vsyncadd [#allocation3], %s16
      %s19 = sshll.u32 [#allocation2], 4
      %s20 = int_to_ptr.vmem [resolvable:$true] %s19
      %22 = dma.hbm_to_vmem [thread:$0]  %s0, 16, %s20, [#allocation3]
    $region5: #{tpu_custom_call.1} parent=1 // pred_fallthru
      _
    // Predicated region
    $region6: #{tpu_custom_call.1} parent=1 // pred_check
      _
    $region7: #{tpu_custom_call.1} parent=1 // pred_check_branch
      %24 = sbr.rel (0) target = $region9
    $region8: #{tpu_custom_call.1} parent=1 // pred_region
      %s26 = ssub.s32 640, 640
      %27 = vsyncadd [#allocation6], %s26
      %s28 = sshll.u32 [#allocation5], 4
      %s29 = int_to_ptr.vmem [resolvable:$true] %s28
      %34 = dma.hbm_to_vmem [thread:$0]  %s1, 640, %s29, [#allocation6], 128, 128, 8
    $region9: #{tpu_custom_call.1} parent=1 // pred_fallthru
      _
    // Predicated region
    $region10: #{tpu_custom_call.1} parent=1 // pred_check
      _
    $region11: #{tpu_custom_call.1} parent=1 // pred_check_branch
      %36 = sbr.rel (0) target = $region13
    $region12: #{tpu_custom_call.1} parent=1 // pred_region
      %37 = dma.done [#allocation3], 16
    $region13: #{tpu_custom_call.1} parent=1 // pred_fallthru
      _
    // Predicated region
    $region14: #{tpu_custom_call.1} parent=1 // pred_check
      _
    $region15: #{tpu_custom_call.1} parent=1 // pred_check_branch
      %39 = sbr.rel (0) target = $region17
    $region16: #{tpu_custom_call.1} parent=1 // pred_region
      %40 = dma.done [#allocation6], 640
    $region17: #{tpu_custom_call.1} parent=1 // pred_fallthru
      _
    %v41 = vld [vmem:[#allocation5] sm:$0xff]
    %v42 = vld [vmem:[#allocation5 + $0x8] sm:$0xff]
    %v43 = vld [vmem:[#allocation5 + $0x10] sm:$0xff]
    %v44 = vld [vmem:[#allocation5 + $0x18] sm:$0xff]
    %v45 = vld [vmem:[#allocation5 + $0x20] sm:$0xf]
    %v46 = vld [vmem:[#allocation2] sm:$0x1]
    %v48 = vlaneseq
    %v49 = vshrl.u32 %v48, 7
    %v50 = vsub.s32 0, %v49
    %v51 = vrot.slane %v46, %v50
    %v53 = vmul.f32 %v41, %v51
    %v54 = vmul.f32 %v42, %v51
    %v55 = vmul.f32 %v43, %v51
    %v56 = vmul.f32 %v44, %v51
    %v57 = vmul.f32 %v45, %v51
    %58 = vadd.xlane.f32.xlu0 %v53
    %v59 = vpop.xlane.xlu0 %58
    %60 = vadd.xlane.f32.xlu0 %v54
    %v61 = vpop.xlane.xlu0 %60
    %62 = vadd.xlane.f32.xlu0 %v55
    %v63 = vpop.xlane.xlu0 %62
    %64 = vadd.xlane.f32.xlu0 %v56
    %v65 = vpop.xlane.xlu0 %64
    %vm66 = vcmask 1043456
    %v67 = vsel %vm66, %v57, 0.0
    %68 = vadd.xlane.f32.xlu0 %v67
    %v69 = vpop.xlane.xlu0 %68
    %v70 = vmul.f32 %v59, %v59
    %v71 = vmul.f32 %v61, %v61
    %v72 = vmul.f32 %v63, %v63
    %v73 = vmul.f32 %v65, %v65
    %v74 = vmul.f32 %v69, %v69
    %vm75 = vcmask 7168
    %v76 = vsel %vm75, %v70, 0.0
    %v77 = vsel %vm75, %v71, 0.0
    %v78 = vadd.f32 %v76, %v77
    %v79 = vsel %vm75, %v72, 0.0
    %v80 = vadd.f32 %v78, %v79
    %v81 = vsel %vm75, %v73, 0.0
    %v82 = vadd.f32 %v80, %v81
    %vm83 = vcmask 3072
    %v84 = vsel %vm83, %v74, 0.0
    %v85 = vadd.f32 %v82, %v84
    %86 = vadd.xlane.f32.xlu0 %v85
    %v87 = vpop.xlane.xlu0 %86
    %v88 = vrot.slane %v87, 4
    %v89 = vadd.f32 %v87, %v88
    %v90 = vrot.slane %v89, 2
    %v91 = vadd.f32 %v89, %v90
    %v92 = vrot.slane %v91, 1
    %v93 = vadd.f32 %v91, %v92
    %s94 = vtos %v93
    %s95 = sadd.f32 %s94, 1e-24
    %v96 = vstv %s95
    %v97 = vrsqrt.pop %v96
    %s98 = vtos %v97
    %v99 = vstv %s98
    %v100 = vmul.f32 %v59, %v99
    %v101 = vmul.f32 %v61, %v99
    %v102 = vmul.f32 %v63, %v99
    %v103 = vmul.f32 %v65, %v99
    %v104 = vmul.f32 %v69, %v99
    %105 = vxpose.xlu0.b32.start [1/16] %v100, 128
    %106 = vxpose.xlu0.b32.cont [2/16] %v101, 128
    %107 = vxpose.xlu0.b32.cont [3/16] %v102, 128
    %108 = vxpose.xlu0.b32.cont [4/16] %v103, 128
    %109 = vxpose.xlu0.b32.cont [5/16] %v104, 128
    %110 = vxpose.xlu0.b32.cont [6/16] 0.0, 128
    %111 = vxpose.xlu0.b32.cont [7/16] 0.0, 128
    %112 = vxpose.xlu0.b32.cont [8/16] 0.0, 128
    %113 = vxpose.xlu0.b32.cont [9/16] 0.0, 128
    %114 = vxpose.xlu0.b32.cont [10/16] 0.0, 128
    %115 = vxpose.xlu0.b32.cont [11/16] 0.0, 128
    %116 = vxpose.xlu0.b32.cont [12/16] 0.0, 128
    %117 = vxpose.xlu0.b32.cont [13/16] 0.0, 128
    %118 = vxpose.xlu0.b32.cont [14/16] 0.0, 128
    %119 = vxpose.xlu0.b32.cont [15/16] 0.0, 128
    %120 = vxpose.xlu0.b32.end [16/16] 0.0, 128
    %v121 = vpop.trf.xlu0
    %v122 = vpop.trf.xlu0
    %v123 = vpop.trf.xlu0
    %v124 = vpop.trf.xlu0
    %v125 = vpop.trf.xlu0
    %v126 = vpop.trf.xlu0
    %v127 = vpop.trf.xlu0
    %v128 = vpop.trf.xlu0
    %v129 = vpop.trf.xlu0
    %v130 = vpop.trf.xlu0
    %v131 = vpop.trf.xlu0
    %v132 = vpop.trf.xlu0
    %v133 = vpop.trf.xlu0
    %v134 = vpop.trf.xlu0
    %v135 = vpop.trf.xlu0
    %v136 = vpop.trf.xlu0
    %vm137 = vcmask 293888
    %v139 = vsel %vm137, %v121, 0
    %v142 = vsel %vm66, %v45, 0
    %144 = vmatprep.subr.mxu0 0.0
    %145 = vmatpush1.msra.mxu0 %v41
    %146 = vmatprep.subr.mxu0 0.0
    %147 = vmatpush1.msra.mxu0 %v42
    %148 = vmatprep.subr.mxu0 0.0
    %149 = vmatpush1.msra.mxu0 %v43
    %150 = vmatprep.subr.mxu0 0.0
    %151 = vmatpush1.msra.mxu0 %v44
    %152 = vmatprep.subr.mxu0 0.0
    %153 = vmatpush1.msra.mxu0 %v142
    %154 = vmatprep.subr.mxu0 0.0
    %155 = vmatpush1.msra.mxu0 0.0
    %156 = vmatprep.subr.mxu0 0.0
    %157 = vmatpush1.msra.mxu0 0.0
    %158 = vmatprep.subr.mxu0 0.0
    %159 = vmatpush1.msra.mxu0 0.0
    %160 = vmatprep.subr.mxu0 0.0
    %161 = vmatpush1.msra.mxu0 0.0
    %162 = vmatprep.subr.mxu0 0.0
    %163 = vmatpush1.msra.mxu0 0.0
    %164 = vmatprep.subr.mxu0 0.0
    %165 = vmatpush1.msra.mxu0 0.0
    %166 = vmatprep.subr.mxu0 0.0
    %167 = vmatpush1.msra.mxu0 0.0
    %168 = vmatprep.subr.mxu0 0.0
    %169 = vmatpush1.msra.mxu0 0.0
    %170 = vmatprep.subr.mxu0 0.0
    %171 = vmatpush1.msra.mxu0 0.0
    %172 = vmatprep.subr.mxu0 0.0
    %173 = vmatpush1.msra.mxu0 0.0
    %174 = vmatprep.subr.mxu0 0.0
    %175 = vmatpush1.msra.mxu0 0.0
    %176 = vmatprep.subr.mxu0 0.0
    %177 = vmatpush1.msra.mxu0 0.0
    %178 = vmatprep.subr.mxu0 0.0
    %179 = vmatpush1.msra.mxu0 0.0
    %180 = vmatprep.subr.mxu0 0.0
    %181 = vmatpush1.msra.mxu0 0.0
    %182 = vmatprep.subr.mxu0 0.0
    %183 = vmatpush1.msra.mxu0 0.0
    %184 = vmatprep.subr.mxu0 0.0
    %185 = vmatpush1.msra.mxu0 0.0
    %186 = vmatprep.subr.mxu0 0.0
    %187 = vmatpush1.msra.mxu0 0.0
    %188 = vmatprep.subr.mxu0 0.0
    %189 = vmatpush1.msra.mxu0 0.0
    %190 = vmatprep.subr.mxu0 0.0
    %191 = vmatpush1.msra.mxu0 0.0
    %192 = vmatprep.subr.mxu0 0.0
    %193 = vmatpush1.msra.mxu0 0.0
    %194 = vmatprep.subr.mxu0 0.0
    %195 = vmatpush1.msra.mxu0 0.0
    %196 = vmatprep.subr.mxu0 0.0
    %197 = vmatpush1.msra.mxu0 0.0
    %198 = vmatprep.subr.mxu0 0.0
    %199 = vmatpush1.msra.mxu0 0.0
    %200 = vmatprep.subr.mxu0 0.0
    %201 = vmatpush1.msra.mxu0 0.0
    %202 = vmatprep.subr.mxu0 0.0
    %203 = vmatpush1.msra.mxu0 0.0
    %204 = vmatprep.subr.mxu0 0.0
    %205 = vmatpush1.msra.mxu0 0.0
    %206 = vmatprep.subr.mxu0 0.0
    %207 = vmatpush1.msra.mxu0 0.0
    %208 = vmatprep.mubr.f32.mxu0 0.0
    %209 = vmatmul.mubr.f32.gmra.mrb[0].mxu0 %v139
    %v210 = vpop.f32.mrb[0].mxu0
    %v211 = vadd.f32 0.0, %v210
    %v212 = vpop.f32.mrb[0].mxu0
    %213 = vdwg.mxu0
    %v214 = vmul.f32 %v211, %v211
    %vm215 = vcmask 1040384
    %v216 = vsel %vm215, %v214, 0.0
    %217 = vadd.xlane.f32.xlu0 %v216
    %v218 = vpop.xlane.xlu0 %217
    %v219 = vrot.slane %v218, 4
    %v220 = vadd.f32 %v218, %v219
    %v221 = vrot.slane %v220, 2
    %v222 = vadd.f32 %v220, %v221
    %v223 = vrot.slane %v222, 1
    %v224 = vadd.f32 %v222, %v223
    %s225 = vtos %v224
    %s226 = sadd.f32 %s225, 1e-24
    %v227 = vstv %s226
    %v228 = vrsqrt.pop %v227
    %s229 = vtos %v228
    %v230 = vstv %s229
    %v231 = vmul.f32 %v211, %v230
    %v232 = vmul.f32 %v231, %v211
    %v233 = vsel %vm215, %v232, 0.0
    %234 = vadd.xlane.f32.xlu0 %v233
    %v235 = vpop.xlane.xlu0 %234
    %v236 = vrot.slane %v235, 4
    %v237 = vadd.f32 %v235, %v236
    %v238 = vrot.slane %v237, 2
    %v239 = vadd.f32 %v237, %v238
    %v240 = vrot.slane %v239, 1
    %v241 = vadd.f32 %v239, %v240
    %s242 = vtos %v241
    %243 = vst [vmem:[#allocation8] sm:$0x1] %v231
    %v244 = vstv %s242
    %v245 = vrcp.pop %v244
    %v246 = vmul.f32 %v41, %v245
    %v247 = vmul.f32 %v42, %v245
    %v248 = vmul.f32 %v43, %v245
    %v249 = vmul.f32 %v44, %v245
    %v250 = vmul.f32 %v45, %v245
    %v251 = vpack.c.bf16 %v247, %v246
    %v252 = vpack.c.bf16 %v249, %v248
    %v253 = vpack.c.bf16 %v250, %v250
    %v257 = vunpack.c.l.b16 %v251
    %v258 = vunpack.c.h.b16 %v251
    %v259 = vunpack.c.l.b16 %v252
    %v260 = vunpack.c.h.b16 %v252
    %v261 = vunpack.c.l.b16 %v253
    %v262 = vpack.c.b16 %v257, %v257
    %v263 = vpack.c.b16 %v258, %v258
    %v264 = vpack.c.b16 %v259, %v259
    %v265 = vpack.c.b16 %v260, %v260
    %v266 = vpack.c.b16 %v261, %v261
    %272 = vst [vmem:[#allocation7] sm:$0xf] %v262
    %273 = vst [vmem:[#allocation7 + $0x4] sm:$0xf] %v263
    %274 = vst [vmem:[#allocation7 + $0x8] sm:$0xf] %v264
    %275 = vst [vmem:[#allocation7 + $0xc] sm:$0xf] %v265
    %276 = vst [vmem:[#allocation7 + $0x10] sm:$0x3] %v266
    // Predicated region
    $region18: #{tpu_custom_call.1} parent=1 // pred_check
      _
    $region19: #{tpu_custom_call.1} parent=1 // pred_check_branch
      %278 = sbr.rel (0) target = $region21
    $region20: #{tpu_custom_call.1} parent=1 // pred_region
      %s280 = ssub.s32 320, 320
      %281 = vsyncadd [#allocation4], %s280
      %s282 = sshll.u32 [#allocation7], 4
      %s283 = int_to_ptr.vmem [resolvable:$true] %s282
      %288 = dma.vmem_to_hbm [thread:$0]  %s283, 320, %s2, [#allocation4], 64, 64, 4
    $region21: #{tpu_custom_call.1} parent=1 // pred_fallthru
      _
    // Predicated region
    $region22: #{tpu_custom_call.1} parent=1 // pred_check
      _
    $region23: #{tpu_custom_call.1} parent=1 // pred_check_branch
      %290 = sbr.rel (0) target = $region25
    $region24: #{tpu_custom_call.1} parent=1 // pred_region
      %s292 = ssub.s32 16, 16
      %293 = vsyncadd [#allocation9], %s292
      %s295 = sshll.u32 [#allocation8], 4
      %s296 = int_to_ptr.vmem [resolvable:$true] %s295
      %298 = dma.vmem_to_hbm [thread:$0]  %s296, 16, %s3, [#allocation9]
    $region25: #{tpu_custom_call.1} parent=1 // pred_fallthru
      _
    // Predicated region
    $region26: #{tpu_custom_call.1} parent=1 // pred_check
      _
    $region27: #{tpu_custom_call.1} parent=1 // pred_check_branch
      %300 = sbr.rel (0) target = $region29
    $region28: #{tpu_custom_call.1} parent=1 // pred_region
      %301 = dma.done [#allocation4], 320
    $region29: #{tpu_custom_call.1} parent=1 // pred_fallthru
      _
    // Predicated region
    $region30: #{tpu_custom_call.1} parent=1 // pred_check
      _
    $region31: #{tpu_custom_call.1} parent=1 // pred_check_branch
      %303 = sbr.rel (0) target = $region33
    $region32: #{tpu_custom_call.1} parent=1 // pred_region
      %304 = dma.done [#allocation9], 16
    $region33: #{tpu_custom_call.1} parent=1 // pred_fallthru
      _
    %305 = vsyncpa [#allocation3], 1
    %306 = vsyncpa [#allocation6], 1
    %307 = vsyncpa [#allocation4], 1
    %308 = vsyncpa [#allocation9], 1

</llo_original>
